<compile_context>
chip_gen: v5e
topology: v5e:2x2
jax: 0.10.0
libtpu: 0.0.40
codegen_flags: <defaults>
</compile_context>

<pallas_src>
import functools
import math

import jax
import jax.numpy as jnp
import numpy as np
from jax.experimental import pallas as pl
from jax.experimental.pallas import tpu as pltpu

BN_EPS = 1e-5      # PyTorch BatchNorm1d default eps
NORM_EPS = 1e-12   # PyTorch F.normalize default eps
FP = 128           # lane-dense padded feature width


# ------------------------------ conv-stack kernel ------------------------------
# One grid step == one graph in the batch. adj / weights have constant index maps
# (stay resident in VMEM across the whole grid).

def _conv_stack_kernel(adj_ref, x_ref, cw_ref, cb_ref, emb_ref, pooled_ref,
                       *, num_conv, bn_scale, mxu_dtype):
    adj = adj_ref[...].astype(mxu_dtype)                 # (N, N), add_self folded in
    h = x_ref[...]                                       # (N, FP) f32, padded cols zero

    for li in range(num_conv):
        w = cw_ref[li].astype(mxu_dtype)                 # (FP, FP)
        bias = cb_ref[li]                                # (1, FP) f32
        is_last = (li == num_conv - 1)

        # message passing + feature transform: two lane-dense MXU matmuls (bf16 in, f32 acc)
        m = jnp.dot(adj, h.astype(mxu_dtype), preferred_element_type=jnp.float32)   # (N, FP)
        y = jnp.dot(m.astype(mxu_dtype), w, preferred_element_type=jnp.float32) + bias

        # L2 normalize over features (padded cols are zero -> norm unchanged); rsqrt on EUP
        ss = jnp.sum(y * y, axis=-1, keepdims=True)
        inv = jax.lax.rsqrt(ss + NORM_EPS * NORM_EPS)
        if is_last:
            h = y * inv                                  # no ReLU / BN on the last conv
        else:
            # ReLU commutes with the positive scale -> single fused multiply
            h = jnp.maximum(y * (inv * bn_scale), 0.0)

    emb_ref[...] = h                                     # lane-dense (N, 128) store
    pooled_ref[0] = jnp.max(h, axis=0, keepdims=True)    # graph readout: max over nodes


# -------------------------------- fnn_3l head ----------------------------------

def _fnn_head_kernel(z_ref, fw_ref, fb_ref, y_ref, *, bn_scale, mxu_dtype):
    z = z_ref[...]                                       # (8, FP) f32 (rows >= B are zero pad)
    for li in range(2):
        w = fw_ref[li].astype(mxu_dtype)
        z = jnp.maximum(
            jnp.dot(z.astype(mxu_dtype), w, preferred_element_type=jnp.float32) + fb_ref[li],
            0.0) * bn_scale
    y_ref[...] = (jnp.dot(z.astype(mxu_dtype), fw_ref[2].astype(mxu_dtype),
                          preferred_element_type=jnp.float32) + fb_ref[2])


# --------------------------------- wrapper -------------------------------------

def _pad_to(a, shape):
    out = jnp.zeros(shape, a.dtype)
    return out.at[tuple(slice(0, s) for s in a.shape)].set(a)


def gcnnet_forward(params, x, adj, *, num_layers, concat=False, bn=True,
                   mxu_dtype=jnp.bfloat16):
    # TODO(synk): concat=True path not implemented (reference concat width mismatches
    #             fnn_3l's declared input width; see header note).
    assert not concat, "concat=True path has a shape bug in the reference module"

    B, N, Fin = x.shape
    L = num_layers
    emb_dim = params["w_last"].shape[1]
    label_dim = params["fc3_b"].shape[0]
    add_self = not concat

    # Single (N, N) adjacency operand; add_self folded in (no batch kron).
    adj1 = adj + jnp.eye(N, dtype=adj.dtype) if add_self else adj

    # Lane-dense, zero-padded operands (padding is mathematically inert).
    xp = _pad_to(x.reshape(B * N, Fin), (B * N, FP))

    conv_ws = [params["w_first"]] + list(params["w_block"]) + [params["w_last"]]
    conv_bs = [params["b_first"]] + list(params["b_block"]) + [params["b_last"]]
    cw = jnp.stack([_pad_to(w, (FP, FP)) for w in conv_ws])                    # (L, FP, FP)
    cb = jnp.stack([_pad_to(b.reshape(1, -1), (1, FP)) for b in conv_bs])      # (L, 1, FP)

    fw = jnp.stack([_pad_to(params["fc1_w"], (FP, FP)),
                    _pad_to(params["fc2_w"], (FP, FP)),
                    _pad_to(params["fc3_w"], (FP, FP))])                       # (3, FP, FP)
    fb = jnp.stack([_pad_to(params["fc1_b"].reshape(1, -1), (1, FP)),
                    _pad_to(params["fc2_b"].reshape(1, -1), (1, FP)),
                    _pad_to(params["fc3_b"].reshape(1, -1), (1, FP))])         # (3, 1, FP)

    bn_scale = 1.0 / math.sqrt(1.0 + BN_EPS)
    bn_scale_conv = bn_scale if bn else 1.0

    conv_kernel = functools.partial(_conv_stack_kernel, num_conv=L,
                                    bn_scale=bn_scale_conv, mxu_dtype=mxu_dtype)

    flops = B * L * (2 * N * N * FP + 2 * N * FP * FP)
    bytes_accessed = 4 * (N * N + 2 * B * N * FP + L * FP * FP + L * FP + B * FP)

    # Call 1: batched conv stack. Batch axis is a parallel grid dimension; adj and the
    # stacked weights are VMEM-resident across the whole grid (constant index maps).
    emb, pooled = pl.pallas_call(
        conv_kernel,
        grid=(B,),
        in_specs=[
            pl.BlockSpec((N, N), lambda b: (0, 0)),            # adj1 (resident)
            pl.BlockSpec((N, FP), lambda b: (b, 0)),           # x block for graph b
            pl.BlockSpec((L, FP, FP), lambda b: (0, 0, 0)),    # conv weights (resident)
            pl.BlockSpec((L, 1, FP), lambda b: (0, 0, 0)),     # conv biases (resident)
        ],
        out_specs=[
            pl.BlockSpec((N, FP), lambda b: (b, 0)),           # node embeddings
            pl.BlockSpec((1, 1, FP), lambda b: (b, 0, 0)),     # per-graph max readout
        ],
        out_shape=(jax.ShapeDtypeStruct((B * N, FP), jnp.float32),
                   jax.ShapeDtypeStruct((B, 1, FP), jnp.float32)),
        compiler_params=pltpu.CompilerParams(
            dimension_semantics=("parallel",),
            vmem_limit_bytes=32 * 1024 * 1024),
        cost_estimate=pl.CostEstimate(flops=flops, transcendentals=B * L * N,
                                      bytes_accessed=bytes_accessed),
    )(adj1, xp, cw, cb)

    # Pad the pooled features to a full (8, 128) sublane tile so the head's compute and
    # the final ypred store are unmasked full-tile ops (tiny XLA pad between the calls).
    B_pad = max(8, ((B + 7) // 8) * 8)
    pooled8 = jnp.zeros((B_pad, FP), jnp.float32).at[:B].set(pooled.reshape(B, FP))

    head_kernel = functools.partial(_fnn_head_kernel, bn_scale=bn_scale, mxu_dtype=mxu_dtype)
    ypred_pad = pl.pallas_call(
        head_kernel,
        out_shape=jax.ShapeDtypeStruct((B_pad, FP), jnp.float32),
    )(pooled8, fw, fb)

    emb = emb.reshape(B, N, FP)[:, :, :emb_dim]
    ypred = ypred_pad[:B, :label_dim]
    return ypred, emb


# ------------------------------- parameter init --------------------------------

def xavier_uniform(key, fan_in, fan_out, gain=1.0):
    bound = gain * math.sqrt(6.0 / (fan_in + fan_out))
    return jax.random.uniform(key, (fan_in, fan_out), jnp.float32, -bound, bound)


def init_params(key, input_dim, hidden_dim, embedding_dim, label_dim, num_layers, concat):
    relu_gain = math.sqrt(2.0)
    pred_input_dim = (hidden_dim * (num_layers - 1) + embedding_dim) if concat else embedding_dim
    nhid = hidden_dim   # pred_hidden_dims defaults to hidden_dim when []
    keys = jax.random.split(key, 16)
    p = {}
    # GraphConv weights: xavier_uniform(relu gain); biases init.constant 0.0
    p["w_first"] = xavier_uniform(keys[0], input_dim, hidden_dim, relu_gain)
    p["b_first"] = jnp.zeros((hidden_dim,), jnp.float32)
    p["w_block"] = [xavier_uniform(keys[1 + i], hidden_dim, hidden_dim, relu_gain)
                    for i in range(num_layers - 2)]
    p["b_block"] = [jnp.zeros((hidden_dim,), jnp.float32) for _ in range(num_layers - 2)]
    p["w_last"] = xavier_uniform(keys[6], hidden_dim, embedding_dim, relu_gain)
    p["b_last"] = jnp.zeros((embedding_dim,), jnp.float32)
    # fnn_3l: Linear weights xavier_uniform; biases small uniform
    p["fc1_w"] = xavier_uniform(keys[7], pred_input_dim, nhid)
    p["fc1_b"] = jax.random.uniform(keys[8], (nhid,), jnp.float32,
                                    -1.0 / math.sqrt(pred_input_dim), 1.0 / math.sqrt(pred_input_dim))
    p["fc2_w"] = xavier_uniform(keys[9], nhid, nhid)
    p["fc2_b"] = jax.random.uniform(keys[10], (nhid,), jnp.float32,
                                    -1.0 / math.sqrt(nhid), 1.0 / math.sqrt(nhid))
    p["fc3_w"] = xavier_uniform(keys[11], nhid, label_dim)
    p["fc3_b"] = jax.random.uniform(keys[12], (label_dim,), jnp.float32,
                                    -1.0 / math.sqrt(nhid), 1.0 / math.sqrt(nhid))
    return p


# --------------------------- pure-JAX reference check ---------------------------

def reference_forward(params, x, adj, *, num_layers, concat=False, bn=True):
    add_self = not concat
    bn_scale = 1.0 / math.sqrt(1.0 + BN_EPS)

    def gc(xx, w, b, do_relu, apply_bn):
        y = jnp.einsum("nm,bmf->bnf", adj, xx)
        if add_self:
            y = y + xx
        y = y @ w + b
        nrm = jnp.sqrt(jnp.sum(y * y, axis=-1, keepdims=True))
        y = y / jnp.maximum(nrm, NORM_EPS)
        if do_relu:
            y = jnp.maximum(y, 0.0)
        if apply_bn:
            y = y * bn_scale
        return y, jnp.max(y, axis=1)

    h, out = gc(x, params["w_first"], params["b_first"], True, bn)
    out_all = [out]
    for i in range(num_layers - 2):
        h, out = gc(h, params["w_block"][i], params["b_block"][i], True, bn)
        out_all.append(out)
    h, out = gc(h, params["w_last"], params["b_last"], False, False)
    output = jnp.concatenate(out_all, axis=1) if concat else out
    hh = jnp.maximum(output @ params["fc1_w"] + params["fc1_b"], 0.0) * bn_scale
    hh = jnp.maximum(hh @ params["fc2_w"] + params["fc2_b"], 0.0) * bn_scale
    ypred = hh @ params["fc3_w"] + params["fc3_b"]
    return ypred, h


# ------------------------------------ main --------------------------------------

if __name__ == "__main__":
    B, N = 2, 16
    input_dim = N          # BatchNorm1d(input_dim) is applied over the node dim -> N == input_dim
    hidden_dim, embedding_dim, label_dim = 32, 32, 4
    num_layers = 3
    concat = False         # concat=True as written in the reference has a shape bug (see header)

    key = jax.random.PRNGKey(0)
    kx, kadj, kp = jax.random.split(key, 3)
    x = jax.random.normal(kx, (B, N, input_dim), jnp.float32)
    a = jax.random.uniform(kadj, (N, N), jnp.float32)
    adj = (a + a.T) * 0.5 + jnp.eye(N, dtype=jnp.float32)
    adj = adj / jnp.sum(adj, axis=1, keepdims=True)    # row-normalized dense adjacency

    params = init_params(kp, input_dim, hidden_dim, embedding_dim, label_dim, num_layers, concat)

    fwd = jax.jit(functools.partial(gcnnet_forward, num_layers=num_layers, concat=concat, bn=True))
    ypred, node_emb = fwd(params, x, adj)
    ypred = jax.block_until_ready(ypred)
    node_emb = jax.block_until_ready(node_emb)

    ref_y, ref_emb = reference_forward(params, x, adj, num_layers=num_layers, concat=concat, bn=True)
    # Tolerance 2e-2: MXU matmuls use bf16 operands (f32 accumulation); elementwise math is f32.
    np.testing.assert_allclose(np.asarray(ypred), np.asarray(ref_y), rtol=2e-2, atol=2e-2)
    np.testing.assert_allclose(np.asarray(node_emb), np.asarray(ref_emb), rtol=2e-2, atol=2e-2)

    print("KERNEL_OK")
</pallas_src>

<mosaic_0001>
module attributes {stable_mosaic.version = 11 : i64} {
  func.func @_conv_stack_kernel(%arg0: i32, %arg1: memref<16x16xf32, #tpu.memory_space<vmem>>, %arg2: memref<16x128xf32, #tpu.memory_space<vmem>>, %arg3: memref<3x128x128xf32, #tpu.memory_space<vmem>>, %arg4: memref<3x1x128xf32, #tpu.memory_space<vmem>>, %arg5: memref<16x128xf32, #tpu.memory_space<vmem>>, %arg6: memref<1x1x128xf32, #tpu.memory_space<vmem>>) attributes {dimension_semantics = [#tpu.dimension_semantics<parallel>], iteration_bounds = array<i64: 2>, scalar_prefetch = 0 : i64, scratch_operands = 0 : i64, tpu.core_type = #tpu.core_type<tc>, window_params = [{pipeline_mode = #tpu.pipeline_mode<synchronous>, transform_indices = @transform_0, window_bounds = array<i64: 16, 16>}, {transform_indices = @transform_1, window_bounds = array<i64: 16, 128>}, {pipeline_mode = #tpu.pipeline_mode<synchronous>, transform_indices = @transform_2, window_bounds = array<i64: 3, 128, 128>}, {pipeline_mode = #tpu.pipeline_mode<synchronous>, transform_indices = @transform_3, window_bounds = array<i64: 3, 1, 128>}, {transform_indices = @transform_4, window_bounds = array<i64: 16, 128>}, {transform_indices = @transform_5, window_bounds = array<i64: 1, 1, 128>}]} {
    %c0 = arith.constant 0 : index
    %c0_0 = arith.constant 0 : index
    %0 = vector.load %arg1[%c0, %c0_0] : memref<16x16xf32, #tpu.memory_space<vmem>>, vector<16x16xf32>
    %1 = arith.truncf %0 : vector<16x16xf32> to vector<16x16xbf16>
    %c0_1 = arith.constant 0 : index
    %c0_2 = arith.constant 0 : index
    %2 = vector.load %arg2[%c0_1, %c0_2] : memref<16x128xf32, #tpu.memory_space<vmem>>, vector<16x128xf32>
    %c0_3 = arith.constant 0 : index
    %c0_4 = arith.constant 0 : index
    %c0_5 = arith.constant 0 : index
    %3 = vector.load %arg3[%c0_3, %c0_4, %c0_5] : memref<3x128x128xf32, #tpu.memory_space<vmem>>, vector<1x128x128xf32>
    %4 = vector.shape_cast %3 : vector<1x128x128xf32> to vector<128x128xf32>
    %5 = arith.truncf %4 : vector<128x128xf32> to vector<128x128xbf16>
    %c0_6 = arith.constant 0 : index
    %c0_7 = arith.constant 0 : index
    %c0_8 = arith.constant 0 : index
    %6 = vector.load %arg4[%c0_6, %c0_7, %c0_8] : memref<3x1x128xf32, #tpu.memory_space<vmem>>, vector<1x1x128xf32>
    %7 = vector.shape_cast %6 : vector<1x1x128xf32> to vector<1x128xf32>
    %8 = arith.truncf %2 : vector<16x128xf32> to vector<16x128xbf16>
    %cst = arith.constant dense<0.000000e+00> : vector<16x128xf32>
    %9 = tpu.matmul %1, %8, %cst {dimension_numbers = #tpu.dot_dimension_numbers<[1], [0], [0], [1], [0, 0, 1, 1], [], []>} : vector<16x16xbf16>, vector<16x128xbf16>, vector<16x128xf32> -> vector<16x128xf32>
    %10 = arith.truncf %9 : vector<16x128xf32> to vector<16x128xbf16>
    %cst_9 = arith.constant dense<0.000000e+00> : vector<16x128xf32>
    %11 = tpu.matmul %10, %5, %cst_9 {dimension_numbers = #tpu.dot_dimension_numbers<[1], [0], [0], [1], [0, 0, 1, 1], [], []>} : vector<16x128xbf16>, vector<128x128xbf16>, vector<16x128xf32> -> vector<16x128xf32>
    %12 = vector.broadcast %7 : vector<1x128xf32> to vector<16x128xf32>
    %13 = arith.addf %11, %12 : vector<16x128xf32>
    %14 = arith.mulf %13, %13 : vector<16x128xf32>
    %cst_10 = arith.constant dense<0.000000e+00> : vector<16xf32>
    %15 = vector.multi_reduction <add>, %14, %cst_10 [1] : vector<16x128xf32> to vector<16xf32>
    %16 = vector.shape_cast %15 : vector<16xf32> to vector<16x1xf32>
    %cst_11 = arith.constant 1.000000e-24 : f32
    %17 = vector.broadcast %cst_11 : f32 to vector<16x1xf32>
    %18 = arith.addf %16, %17 : vector<16x1xf32>
    %19 = math.rsqrt %18 : vector<16x1xf32>
    %cst_12 = arith.constant 0.999994993 : f32
    %20 = vector.broadcast %cst_12 : f32 to vector<16x1xf32>
    %21 = arith.mulf %19, %20 : vector<16x1xf32>
    %22 = vector.broadcast %21 : vector<16x1xf32> to vector<16x128xf32>
    %23 = arith.mulf %13, %22 : vector<16x128xf32>
    %cst_13 = arith.constant 0.000000e+00 : f32
    %24 = vector.broadcast %cst_13 : f32 to vector<16x128xf32>
    %25 = arith.maximumf %23, %24 : vector<16x128xf32>
    %c1 = arith.constant 1 : index
    %c0_14 = arith.constant 0 : index
    %c0_15 = arith.constant 0 : index
    %26 = vector.load %arg3[%c1, %c0_14, %c0_15] : memref<3x128x128xf32, #tpu.memory_space<vmem>>, vector<1x128x128xf32>
    %27 = vector.shape_cast %26 : vector<1x128x128xf32> to vector<128x128xf32>
    %28 = arith.truncf %27 : vector<128x128xf32> to vector<128x128xbf16>
    %c1_16 = arith.constant 1 : index
    %c0_17 = arith.constant 0 : index
    %c0_18 = arith.constant 0 : index
    %29 = vector.load %arg4[%c1_16, %c0_17, %c0_18] : memref<3x1x128xf32, #tpu.memory_space<vmem>>, vector<1x1x128xf32>
    %30 = vector.shape_cast %29 : vector<1x1x128xf32> to vector<1x128xf32>
    %31 = arith.truncf %25 : vector<16x128xf32> to vector<16x128xbf16>
    %cst_19 = arith.constant dense<0.000000e+00> : vector<16x128xf32>
    %32 = tpu.matmul %1, %31, %cst_19 {dimension_numbers = #tpu.dot_dimension_numbers<[1], [0], [0], [1], [0, 0, 1, 1], [], []>} : vector<16x16xbf16>, vector<16x128xbf16>, vector<16x128xf32> -> vector<16x128xf32>
    %33 = arith.truncf %32 : vector<16x128xf32> to vector<16x128xbf16>
    %cst_20 = arith.constant dense<0.000000e+00> : vector<16x128xf32>
    %34 = tpu.matmul %33, %28, %cst_20 {dimension_numbers = #tpu.dot_dimension_numbers<[1], [0], [0], [1], [0, 0, 1, 1], [], []>} : vector<16x128xbf16>, vector<128x128xbf16>, vector<16x128xf32> -> vector<16x128xf32>
    %35 = vector.broadcast %30 : vector<1x128xf32> to vector<16x128xf32>
    %36 = arith.addf %34, %35 : vector<16x128xf32>
    %37 = arith.mulf %36, %36 : vector<16x128xf32>
    %cst_21 = arith.constant dense<0.000000e+00> : vector<16xf32>
    %38 = vector.multi_reduction <add>, %37, %cst_21 [1] : vector<16x128xf32> to vector<16xf32>
    %39 = vector.shape_cast %38 : vector<16xf32> to vector<16x1xf32>
    %cst_22 = arith.constant 1.000000e-24 : f32
    %40 = vector.broadcast %cst_22 : f32 to vector<16x1xf32>
    %41 = arith.addf %39, %40 : vector<16x1xf32>
    %42 = math.rsqrt %41 : vector<16x1xf32>
    %cst_23 = arith.constant 0.999994993 : f32
    %43 = vector.broadcast %cst_23 : f32 to vector<16x1xf32>
    %44 = arith.mulf %42, %43 : vector<16x1xf32>
    %45 = vector.broadcast %44 : vector<16x1xf32> to vector<16x128xf32>
    %46 = arith.mulf %36, %45 : vector<16x128xf32>
    %cst_24 = arith.constant 0.000000e+00 : f32
    %47 = vector.broadcast %cst_24 : f32 to vector<16x128xf32>
    %48 = arith.maximumf %46, %47 : vector<16x128xf32>
    %c2 = arith.constant 2 : index
    %c0_25 = arith.constant 0 : index
    %c0_26 = arith.constant 0 : index
    %49 = vector.load %arg3[%c2, %c0_25, %c0_26] : memref<3x128x128xf32, #tpu.memory_space<vmem>>, vector<1x128x128xf32>
    %50 = vector.shape_cast %49 : vector<1x128x128xf32> to vector<128x128xf32>
    %51 = arith.truncf %50 : vector<128x128xf32> to vector<128x128xbf16>
    %c2_27 = arith.constant 2 : index
    %c0_28 = arith.constant 0 : index
    %c0_29 = arith.constant 0 : index
    %52 = vector.load %arg4[%c2_27, %c0_28, %c0_29] : memref<3x1x128xf32, #tpu.memory_space<vmem>>, vector<1x1x128xf32>
    %53 = vector.shape_cast %52 : vector<1x1x128xf32> to vector<1x128xf32>
    %54 = arith.truncf %48 : vector<16x128xf32> to vector<16x128xbf16>
    %cst_30 = arith.constant dense<0.000000e+00> : vector<16x128xf32>
    %55 = tpu.matmul %1, %54, %cst_30 {dimension_numbers = #tpu.dot_dimension_numbers<[1], [0], [0], [1], [0, 0, 1, 1], [], []>} : vector<16x16xbf16>, vector<16x128xbf16>, vector<16x128xf32> -> vector<16x128xf32>
    %56 = arith.truncf %55 : vector<16x128xf32> to vector<16x128xbf16>
    %cst_31 = arith.constant dense<0.000000e+00> : vector<16x128xf32>
    %57 = tpu.matmul %56, %51, %cst_31 {dimension_numbers = #tpu.dot_dimension_numbers<[1], [0], [0], [1], [0, 0, 1, 1], [], []>} : vector<16x128xbf16>, vector<128x128xbf16>, vector<16x128xf32> -> vector<16x128xf32>
    %58 = vector.broadcast %53 : vector<1x128xf32> to vector<16x128xf32>
    %59 = arith.addf %57, %58 : vector<16x128xf32>
    %60 = arith.mulf %59, %59 : vector<16x128xf32>
    %cst_32 = arith.constant dense<0.000000e+00> : vector<16xf32>
    %61 = vector.multi_reduction <add>, %60, %cst_32 [1] : vector<16x128xf32> to vector<16xf32>
    %62 = vector.shape_cast %61 : vector<16xf32> to vector<16x1xf32>
    %cst_33 = arith.constant 1.000000e-24 : f32
    %63 = vector.broadcast %cst_33 : f32 to vector<16x1xf32>
    %64 = arith.addf %62, %63 : vector<16x1xf32>
    %65 = math.rsqrt %64 : vector<16x1xf32>
    %66 = vector.broadcast %65 : vector<16x1xf32> to vector<16x128xf32>
    %67 = arith.mulf %59, %66 : vector<16x128xf32>
    %c0_34 = arith.constant 0 : index
    %c0_35 = arith.constant 0 : index
    %68 = vector.load %arg5[%c0_34, %c0_35] : memref<16x128xf32, #tpu.memory_space<vmem>>, vector<16x128xf32>
    tpu.vector_store %arg5[%c0_34, %c0_35], %67 {strides = array<i32>} : memref<16x128xf32, #tpu.memory_space<vmem>>, vector<16x128xf32>,
    %cst_36 = arith.constant dense<0xFF800000> : vector<128xf32>
    %69 = vector.multi_reduction <maximumf>, %67, %cst_36 [0] : vector<16x128xf32> to vector<128xf32>
    %70 = vector.shape_cast %69 : vector<128xf32> to vector<1x128xf32>
    %c0_37 = arith.constant 0 : index
    %c0_38 = arith.constant 0 : index
    %c0_39 = arith.constant 0 : index
    %71 = vector.load %arg6[%c0_37, %c0_38, %c0_39] : memref<1x1x128xf32, #tpu.memory_space<vmem>>, vector<1x1x128xf32>
    %72 = vector.shape_cast %71 : vector<1x1x128xf32> to vector<1x128xf32>
    %73 = vector.shape_cast %70 : vector<1x128xf32> to vector<1x1x128xf32>
    tpu.vector_store %arg6[%c0_37, %c0_38, %c0_39], %73 {strides = array<i32>} : memref<1x1x128xf32, #tpu.memory_space<vmem>>, vector<1x1x128xf32>,
    return
  }
  func.func @transform_0(%arg0: i32) -> (i32, i32) {
    %c0_i32 = arith.constant 0 : i32
    %c0_i32_0 = arith.constant 0 : i32
    %c0_i32_1 = arith.constant 0 : i32
    return %c0_i32, %c0_i32_0 : i32, i32
  }
  func.func @transform_1(%arg0: i32) -> (i32, i32) {
    %c0_i32 = arith.constant 0 : i32
    %c0_i32_0 = arith.constant 0 : i32
    return %arg0, %c0_i32 : i32, i32
  }
  func.func @transform_2(%arg0: i32) -> (i32, i32, i32) {
    %c0_i32 = arith.constant 0 : i32
    %c0_i32_0 = arith.constant 0 : i32
    %c0_i32_1 = arith.constant 0 : i32
    %c0_i32_2 = arith.constant 0 : i32
    return %c0_i32, %c0_i32_0, %c0_i32_1 : i32, i32, i32
  }
  func.func @transform_3(%arg0: i32) -> (i32, i32, i32) {
    %c0_i32 = arith.constant 0 : i32
    %c0_i32_0 = arith.constant 0 : i32
    %c0_i32_1 = arith.constant 0 : i32
    %c0_i32_2 = arith.constant 0 : i32
    return %c0_i32, %c0_i32_0, %c0_i32_1 : i32, i32, i32
  }
  func.func @transform_4(%arg0: i32) -> (i32, i32) {
    %c0_i32 = arith.constant 0 : i32
    %c0_i32_0 = arith.constant 0 : i32
    return %arg0, %c0_i32 : i32, i32
  }
  func.func @transform_5(%arg0: i32) -> (i32, i32, i32) {
    %c0_i32 = arith.constant 0 : i32
    %c0_i32_0 = arith.constant 0 : i32
    %c0_i32_1 = arith.constant 0 : i32
    return %arg0, %c0_i32, %c0_i32_0 : i32, i32, i32
  }
}

module attributes {stable_mosaic.version = 11 : i64} {
  func.func @_fnn_head_kernel(%arg0: memref<8x128xf32, #tpu.memory_space<vmem>>, %arg1: memref<3x128x128xf32, #tpu.memory_space<vmem>>, %arg2: memref<3x1x128xf32, #tpu.memory_space<vmem>>, %arg3: memref<8x128xf32, #tpu.memory_space<vmem>>) attributes {dimension_semantics = [], scalar_prefetch = 0 : i64, scratch_operands = 0 : i64, tpu.core_type = #tpu.core_type<tc>} {
    %c0 = arith.constant 0 : index
    %c0_0 = arith.constant 0 : index
    %0 = vector.load %arg0[%c0, %c0_0] : memref<8x128xf32, #tpu.memory_space<vmem>>, vector<8x128xf32>
    %c0_1 = arith.constant 0 : index
    %c0_2 = arith.constant 0 : index
    %c0_3 = arith.constant 0 : index
    %1 = vector.load %arg1[%c0_1, %c0_2, %c0_3] : memref<3x128x128xf32, #tpu.memory_space<vmem>>, vector<1x128x128xf32>
    %2 = vector.shape_cast %1 : vector<1x128x128xf32> to vector<128x128xf32>
    %3 = arith.truncf %2 : vector<128x128xf32> to vector<128x128xbf16>
    %4 = arith.truncf %0 : vector<8x128xf32> to vector<8x128xbf16>
    %cst = arith.constant dense<0.000000e+00> : vector<8x128xf32>
    %5 = tpu.matmul %4, %3, %cst {dimension_numbers = #tpu.dot_dimension_numbers<[1], [0], [0], [1], [0, 0, 1, 1], [], []>} : vector<8x128xbf16>, vector<128x128xbf16>, vector<8x128xf32> -> vector<8x128xf32>
    %c0_4 = arith.constant 0 : index
    %c0_5 = arith.constant 0 : index
    %c0_6 = arith.constant 0 : index
    %6 = vector.load %arg2[%c0_4, %c0_5, %c0_6] : memref<3x1x128xf32, #tpu.memory_space<vmem>>, vector<1x1x128xf32>
    %7 = vector.shape_cast %6 : vector<1x1x128xf32> to vector<1x128xf32>
    %8 = vector.broadcast %7 : vector<1x128xf32> to vector<8x128xf32>
    %9 = arith.addf %5, %8 : vector<8x128xf32>
    %cst_7 = arith.constant 0.000000e+00 : f32
    %10 = vector.broadcast %cst_7 : f32 to vector<8x128xf32>
    %11 = arith.maximumf %9, %10 : vector<8x128xf32>
    %cst_8 = arith.constant 0.999994993 : f32
    %12 = vector.broadcast %cst_8 : f32 to vector<8x128xf32>
    %13 = arith.mulf %11, %12 : vector<8x128xf32>
    %c1 = arith.constant 1 : index
    %c0_9 = arith.constant 0 : index
    %c0_10 = arith.constant 0 : index
    %14 = vector.load %arg1[%c1, %c0_9, %c0_10] : memref<3x128x128xf32, #tpu.memory_space<vmem>>, vector<1x128x128xf32>
    %15 = vector.shape_cast %14 : vector<1x128x128xf32> to vector<128x128xf32>
    %16 = arith.truncf %15 : vector<128x128xf32> to vector<128x128xbf16>
    %17 = arith.truncf %13 : vector<8x128xf32> to vector<8x128xbf16>
    %cst_11 = arith.constant dense<0.000000e+00> : vector<8x128xf32>
    %18 = tpu.matmul %17, %16, %cst_11 {dimension_numbers = #tpu.dot_dimension_numbers<[1], [0], [0], [1], [0, 0, 1, 1], [], []>} : vector<8x128xbf16>, vector<128x128xbf16>, vector<8x128xf32> -> vector<8x128xf32>
    %c1_12 = arith.constant 1 : index
    %c0_13 = arith.constant 0 : index
    %c0_14 = arith.constant 0 : index
    %19 = vector.load %arg2[%c1_12, %c0_13, %c0_14] : memref<3x1x128xf32, #tpu.memory_space<vmem>>, vector<1x1x128xf32>
    %20 = vector.shape_cast %19 : vector<1x1x128xf32> to vector<1x128xf32>
    %21 = vector.broadcast %20 : vector<1x128xf32> to vector<8x128xf32>
    %22 = arith.addf %18, %21 : vector<8x128xf32>
    %cst_15 = arith.constant 0.000000e+00 : f32
    %23 = vector.broadcast %cst_15 : f32 to vector<8x128xf32>
    %24 = arith.maximumf %22, %23 : vector<8x128xf32>
    %cst_16 = arith.constant 0.999994993 : f32
    %25 = vector.broadcast %cst_16 : f32 to vector<8x128xf32>
    %26 = arith.mulf %24, %25 : vector<8x128xf32>
    %27 = arith.truncf %26 : vector<8x128xf32> to vector<8x128xbf16>
    %c2 = arith.constant 2 : index
    %c0_17 = arith.constant 0 : index
    %c0_18 = arith.constant 0 : index
    %28 = vector.load %arg1[%c2, %c0_17, %c0_18] : memref<3x128x128xf32, #tpu.memory_space<vmem>>, vector<1x128x128xf32>
    %29 = vector.shape_cast %28 : vector<1x128x128xf32> to vector<128x128xf32>
    %30 = arith.truncf %29 : vector<128x128xf32> to vector<128x128xbf16>
    %cst_19 = arith.constant dense<0.000000e+00> : vector<8x128xf32>
    %31 = tpu.matmul %27, %30, %cst_19 {dimension_numbers = #tpu.dot_dimension_numbers<[1], [0], [0], [1], [0, 0, 1, 1], [], []>} : vector<8x128xbf16>, vector<128x128xbf16>, vector<8x128xf32> -> vector<8x128xf32>
    %c2_20 = arith.constant 2 : index
    %c0_21 = arith.constant 0 : index
    %c0_22 = arith.constant 0 : index
    %32 = vector.load %arg2[%c2_20, %c0_21, %c0_22] : memref<3x1x128xf32, #tpu.memory_space<vmem>>, vector<1x1x128xf32>
    %33 = vector.shape_cast %32 : vector<1x1x128xf32> to vector<1x128xf32>
    %34 = vector.broadcast %33 : vector<1x128xf32> to vector<8x128xf32>
    %35 = arith.addf %31, %34 : vector<8x128xf32>
    %c0_23 = arith.constant 0 : index
    %c0_24 = arith.constant 0 : index
    %36 = vector.load %arg3[%c0_23, %c0_24] : memref<8x128xf32, #tpu.memory_space<vmem>>, vector<8x128xf32>
    tpu.vector_store %arg3[%c0_23, %c0_24], %35 {strides = array<i32>} : memref<8x128xf32, #tpu.memory_space<vmem>>, vector<8x128xf32>,
    return
  }
}

</mosaic_0001>

<llo_original>
// kernel: gcnnet_forward.3
$region0: #{gcnnet_forward.3}
  #allocation0 [shape = 'u32[]', space=smem, size = 0x4, offset = 0x4, fixed_abs, tag = 'smem constant byte address 0x4 - core index']
  #allocation1 [shape = 'u32[72,128]{1,0:T(1,128)}', space=vmem, size = 0x9000, scoped, tag = 'internal scratch']
  %s0 = inlined_call_operand.vmem [shape: f32[8,128], index: 0, kind: input, shape index: {}]
  %s1 = inlined_call_operand.vmem [shape: f32[3,128,128], index: 1, kind: input, shape index: {}]
  %s2 = inlined_call_operand.vmem [shape: f32[3,1,128], index: 2, kind: input, shape index: {}]
  %s3 = inlined_call_operand.vmem [shape: f32[8,128], index: 3, kind: output, shape index: {}]
  %s4 = sld [smem:[#allocation0]]
  $region22: #{gcnnet_forward.3} parent=0
    _
  %s6 = ssub.s32 1, %s4
  %s7 = scalar_select 0, %s6, %s4
  // Predicated region
  $region2: #{gcnnet_forward.3} parent=0 // pred_check
    _
  $region3: #{gcnnet_forward.3} parent=0 // pred_check_branch
    %9 = sbr.rel (0) target = $region5
  $region4: #{gcnnet_forward.3} parent=0 // pred_region
    _
  $region5: #{gcnnet_forward.3} parent=0 // pred_fallthru
    _
  // Predicated region
  $region6: #{gcnnet_forward.3} parent=0 // pred_check
    _
  $region7: #{gcnnet_forward.3} parent=0 // pred_check_branch
    %11 = sbr.rel (0) target = $region9
  $region8: #{gcnnet_forward.3} parent=0 // pred_region
    _
  $region9: #{gcnnet_forward.3} parent=0 // pred_fallthru
    _
  // Predicated region
  $region10: #{gcnnet_forward.3} parent=0 // pred_check
    _
  $region11: #{gcnnet_forward.3} parent=0 // pred_check_branch
    %13 = sbr.rel (0) target = $region13
  $region12: #{gcnnet_forward.3} parent=0 // pred_region
    _
  $region13: #{gcnnet_forward.3} parent=0 // pred_fallthru
    _
  %v14 = vld [vmem:[%s0] sm:$0xff]
  %v15 = vld [vmem:[%s1] sm:$0xff]
  %v16 = vld [vmem:[%s1 + $0x8] sm:$0xff]
  %v17 = vld [vmem:[%s1 + $0x10] sm:$0xff]
  %v18 = vld [vmem:[%s1 + $0x18] sm:$0xff]
  %v19 = vld [vmem:[%s1 + $0x20] sm:$0xff]
  %v20 = vld [vmem:[%s1 + $0x28] sm:$0xff]
  %v21 = vld [vmem:[%s1 + $0x30] sm:$0xff]
  %v22 = vld [vmem:[%s1 + $0x38] sm:$0xff]
  %v23 = vld [vmem:[%s1 + $0x40] sm:$0xff]
  %v24 = vld [vmem:[%s1 + $0x48] sm:$0xff]
  %v25 = vld [vmem:[%s1 + $0x50] sm:$0xff]
  %v26 = vld [vmem:[%s1 + $0x58] sm:$0xff]
  %v27 = vld [vmem:[%s1 + $0x60] sm:$0xff]
  %v28 = vld [vmem:[%s1 + $0x68] sm:$0xff]
  %v29 = vld [vmem:[%s1 + $0x70] sm:$0xff]
  %v30 = vld [vmem:[%s1 + $0x78] sm:$0xff]
  %v31 = vpack.c.bf16 %v16, %v15
  %v32 = vpack.c.bf16 %v18, %v17
  %v33 = vpack.c.bf16 %v20, %v19
  %v34 = vpack.c.bf16 %v22, %v21
  %v35 = vpack.c.bf16 %v24, %v23
  %v36 = vpack.c.bf16 %v26, %v25
  %v37 = vpack.c.bf16 %v28, %v27
  %v38 = vpack.c.bf16 %v30, %v29
  %v39 = vpack.c.bf16 %v14, %v14
  %v40 = vld [vmem:[%s2] sm:$0x1]
  %v42 = vperm.slane %v40, 0
  %44 = vmatpush.bf16.msra.mxu0 %v38
  %45 = vmatpush.bf16.msra.mxu0 %v37
  %46 = vmatpush.bf16.msra.mxu0 %v36
  %47 = vmatpush.bf16.msra.mxu0 %v35
  %48 = vmatpush.bf16.msra.mxu0 %v34
  %49 = vmatpush.bf16.msra.mxu0 %v33
  %50 = vmatpush.bf16.msra.mxu0 %v32
  %51 = vmatpush.bf16.msra.mxu0 %v31
  %52 = vmatmul.bf16.gmra.mxu0 %v39
  %v53 = vpop.f32.mrf.mxu0
  %v54 = vadd.f32 %v42, %v53
  %v55 = vpop.f32.mrf.mxu0
  %56 = vdwg.mxu0
  %v57 = vmax.f32 %v54, 0.0
  %v58 = vmul.f32 %v57, 0.999995
  %s59 = scalar_lea.vmem %s1, 128
  %v60 = vld [vmem:[%s59] sm:$0xff]
  %v61 = vld [vmem:[%s59 + $0x8] sm:$0xff]
  %v62 = vld [vmem:[%s59 + $0x10] sm:$0xff]
  %v63 = vld [vmem:[%s59 + $0x18] sm:$0xff]
  %v64 = vld [vmem:[%s59 + $0x20] sm:$0xff]
  %v65 = vld [vmem:[%s59 + $0x28] sm:$0xff]
  %v66 = vld [vmem:[%s59 + $0x30] sm:$0xff]
  %v67 = vld [vmem:[%s59 + $0x38] sm:$0xff]
  %v68 = vld [vmem:[%s59 + $0x40] sm:$0xff]
  %v69 = vld [vmem:[%s59 + $0x48] sm:$0xff]
  %v70 = vld [vmem:[%s59 + $0x50] sm:$0xff]
  %v71 = vld [vmem:[%s59 + $0x58] sm:$0xff]
  %v72 = vld [vmem:[%s59 + $0x60] sm:$0xff]
  %v73 = vld [vmem:[%s59 + $0x68] sm:$0xff]
  %v74 = vld [vmem:[%s59 + $0x70] sm:$0xff]
  %v75 = vld [vmem:[%s59 + $0x78] sm:$0xff]
  %v76 = vpack.c.bf16 %v61, %v60
  %v77 = vpack.c.bf16 %v63, %v62
  %v78 = vpack.c.bf16 %v65, %v64
  %v79 = vpack.c.bf16 %v67, %v66
  %v80 = vpack.c.bf16 %v69, %v68
  %v81 = vpack.c.bf16 %v71, %v70
  %v82 = vpack.c.bf16 %v73, %v72
  %v83 = vpack.c.bf16 %v75, %v74
  %v84 = vpack.c.bf16 %v58, %v58
  %s85 = scalar_lea.vmem %s2, 1
  %v86 = vld [vmem:[%s85] sm:$0x1]
  %v88 = vperm.slane %v86, 0
  %90 = vmatpush.bf16.msra.mxu0 %v83
  %91 = vmatpush.bf16.msra.mxu0 %v82
  %92 = vmatpush.bf16.msra.mxu0 %v81
  %93 = vmatpush.bf16.msra.mxu0 %v80
  %94 = vmatpush.bf16.msra.mxu0 %v79
  %95 = vmatpush.bf16.msra.mxu0 %v78
  %96 = vmatpush.bf16.msra.mxu0 %v77
  %97 = vmatpush.bf16.msra.mxu0 %v76
  %98 = vmatmul.bf16.gmra.mxu0 %v84
  %v99 = vpop.f32.mrf.mxu0
  %v100 = vadd.f32 %v88, %v99
  %v101 = vpop.f32.mrf.mxu0
  %102 = vdwg.mxu0
  %v103 = vmax.f32 %v100, 0.0
  %v104 = vmul.f32 %v103, 0.999995
  %v105 = vpack.c.bf16 %v104, %v104
  %s106 = scalar_lea.vmem %s1, 256
  %v107 = vld [vmem:[%s106] sm:$0xff]
  %v108 = vld [vmem:[%s106 + $0x8] sm:$0xff]
  %v109 = vld [vmem:[%s106 + $0x10] sm:$0xff]
  %v110 = vld [vmem:[%s106 + $0x18] sm:$0xff]
  %v111 = vld [vmem:[%s106 + $0x20] sm:$0xff]
  %v112 = vld [vmem:[%s106 + $0x28] sm:$0xff]
  %v113 = vld [vmem:[%s106 + $0x30] sm:$0xff]
  %v114 = vld [vmem:[%s106 + $0x38] sm:$0xff]
  %v115 = vld [vmem:[%s106 + $0x40] sm:$0xff]
  %v116 = vld [vmem:[%s106 + $0x48] sm:$0xff]
  %v117 = vld [vmem:[%s106 + $0x50] sm:$0xff]
  %v118 = vld [vmem:[%s106 + $0x58] sm:$0xff]
  %v119 = vld [vmem:[%s106 + $0x60] sm:$0xff]
  %v120 = vld [vmem:[%s106 + $0x68] sm:$0xff]
  %v121 = vld [vmem:[%s106 + $0x70] sm:$0xff]
  %v122 = vld [vmem:[%s106 + $0x78] sm:$0xff]
  %v123 = vpack.c.bf16 %v108, %v107
  %v124 = vpack.c.bf16 %v110, %v109
  %v125 = vpack.c.bf16 %v112, %v111
  %v126 = vpack.c.bf16 %v114, %v113
  %v127 = vpack.c.bf16 %v116, %v115
  %v128 = vpack.c.bf16 %v118, %v117
  %v129 = vpack.c.bf16 %v120, %v119
  %v130 = vpack.c.bf16 %v122, %v121
  %s131 = scalar_lea.vmem %s2, 2
  %v132 = vld [vmem:[%s131] sm:$0x1]
  %v134 = vperm.slane %v132, 0
  %136 = vmatpush.bf16.msra.mxu0 %v130
  %137 = vmatpush.bf16.msra.mxu0 %v129
  %138 = vmatpush.bf16.msra.mxu0 %v128
  %139 = vmatpush.bf16.msra.mxu0 %v127
  %140 = vmatpush.bf16.msra.mxu0 %v126
  %141 = vmatpush.bf16.msra.mxu0 %v125
  %142 = vmatpush.bf16.msra.mxu0 %v124
  %143 = vmatpush.bf16.msra.mxu0 %v123
  %144 = vmatmul.bf16.gmra.mxu0 %v105
  %v145 = vpop.f32.mrf.mxu0
  %v146 = vadd.f32 %v134, %v145
  %v147 = vpop.f32.mrf.mxu0
  %148 = vdwg.mxu0
  %149 = vst [vmem:[%s3] sm:$0xff] %v146
  // Predicated region
  $region14: #{gcnnet_forward.3} parent=0 // pred_check
    _
  $region15: #{gcnnet_forward.3} parent=0 // pred_check_branch
    %151 = sbr.rel (0) target = $region17
  $region16: #{gcnnet_forward.3} parent=0 // pred_region
    _
  $region17: #{gcnnet_forward.3} parent=0 // pred_fallthru
    _
  // Predicated region
  $region18: #{gcnnet_forward.3} parent=0 // pred_check
    _
  $region19: #{gcnnet_forward.3} parent=0 // pred_check_branch
    %153 = sbr.rel (0) target = $region21
  $region20: #{gcnnet_forward.3} parent=0 // pred_region
    _
  $region21: #{gcnnet_forward.3} parent=0 // pred_fallthru
    _

// kernel: gcnnet_forward.2
$region0: #{gcnnet_forward.2}
  #allocation0 [shape = 'u32[]', space=smem, size = 0x4, offset = 0x4, fixed_abs, tag = 'smem constant byte address 0x4 - core index']
  #allocation1 [shape = 'u32[72,128]{1,0:T(1,128)}', space=vmem, size = 0x9000, scoped, tag = 'internal scratch']
  %s0 = inlined_call_operand.vmem [shape: f32[16,16], index: 0, kind: input, shape index: {}]
  %s1 = inlined_call_operand.vmem [shape: f32[32,128], index: 1, kind: input, shape index: {}]
  %s2 = inlined_call_operand.vmem [shape: f32[3,128,128], index: 2, kind: input, shape index: {}]
  %s3 = inlined_call_operand.vmem [shape: f32[3,1,128], index: 3, kind: input, shape index: {}]
  %s4 = inlined_call_operand.hbm [shape: f32[32,128], index: 4, kind: output, shape index: {0}]
  %s5 = inlined_call_operand.vmem [shape: f32[2,1,128], index: 5, kind: output, shape index: {1}]
  %6 = xla_tuple %s4, %s5
  %s7 = sld [smem:[#allocation0]]
  $region57: #{gcnnet_forward.2} parent=0
    _
  %s9 = ssub.s32 1, %s7
  %s10 = scalar_select 0, %s9, %s7
  $region1: #{gcnnet_forward.2} parent=0
    #allocation2 [shape = 'u8[16384]{0}', space=vmem, size = 0x4000, scoped, tag = 'output window, operand 0']
    #allocation3 [shape = 's32[2]{0}', space=sflag, size = 0x8, scoped, tag = 'scoped memory for gcnnet_forward.2']
    %11 = vsyncpa [#allocation3], 0
    %s12 = scalar_lea.sflag [#allocation3], 1
    %13 = vsyncpa %s12, 0
    loop: start=0, step=1, limit=4
    $region2: #{gcnnet_forward.2} parent=1 // loop_pre_header
      _
    $region3: #{gcnnet_forward.2} parent=1 // loop_header
      %s15 = sphi 0, %s19
      %p16 = scmp.ge.s32.totalorder %s15, 4
      %s23 = sphi 0, %s23
      %s25 = sphi 0, %s23
      %s26 = sphi 0, %s25
      %s40 = sphi 0, %s26
      %s46 = sphi 0, %s48
      %s49 = sphi 0, %s46
      %s50 = sphi 0, %s49
      %s66 = sphi 0, %s50
      %s70 = sphi 0, %s70
      %s72 = sphi 0, %s70
      %s73 = sphi 0, %s72
      %s87 = sphi 0, %s73
      %s91 = sphi 0, %s91
      %s93 = sphi 0, %s91
      %s94 = sphi 0, %s93
      %s108 = sphi 0, %s94
      %s114 = sphi 0, %s116
      %s117 = sphi 0, %s114
      %s118 = sphi 0, %s117
      %s134 = sphi 0, %s118
      %s140 = sphi 0, %s142
      %s143 = sphi 0, %s140
      %s144 = sphi 0, %s143
      %s160 = sphi 0, %s144
    $region4: #{gcnnet_forward.2} parent=1 // loop_header_branch
      %18 = sbr.rel (%p16) target = $region8
    $region5: #{gcnnet_forward.2} parent=1 // loop_body
      %s20 = ssub.s32 %s15, 1
      %s21 = ssub.s32 %s15, 2
      %s22 = sadd.s32 %s15, 1
      %s24 = sadd.s32 %s23, 1
      %p27 = scmp.eq.s32.totalorder %s15, 1
      %p28 = scmp.ne.s32.totalorder %s23, %s25
      %p29 = scmp.eq.s32.totalorder %s15, 0
      %p30 = por %p28, %p29
      %p31 = scmp.ne.s32.totalorder %s23, %s25
      %p32 = scmp.eq.s32.totalorder %s20, 1
      %p33 = por %p31, %p32
      %p34 = scmp.ne.s32.totalorder %s25, %s26
      %p35 = scmp.eq.s32.totalorder %s20, 0
      %p36 = por %p34, %p35
      %p37 = scmp.ne.s32.totalorder %s25, %s26
      %p38 = scmp.eq.s32.totalorder %s21, 1
      %p39 = por %p37, %p38
      %p41 = scmp.ne.s32.totalorder %s26, %s40
      %p42 = scmp.eq.s32.totalorder %s21, 0
      %p43 = por %p41, %p42
      %s44 = ssub.s32 %s15, %s22
      %p45 = scmp.eq.s32.totalorder %s44, 0
      %s47 = sadd.s32 %s46, 1
      %s48 = scalar_select %p45, %s46, %s47
      %p51 = pneg %p45
      %p52 = scmp.eq.s32.totalorder %s15, 1
      %p53 = por %p51, %p52
      %p54 = scmp.ne.s32.totalorder %s46, %s49
      %p55 = scmp.eq.s32.totalorder %s15, 0
      %p56 = por %p54, %p55
      %p57 = scmp.ne.s32.totalorder %s46, %s49
      %p58 = scmp.eq.s32.totalorder %s20, 1
      %p59 = por %p57, %p58
      %p60 = scmp.ne.s32.totalorder %s49, %s50
      %p61 = scmp.eq.s32.totalorder %s20, 0
      %p62 = por %p60, %p61
      %p63 = scmp.ne.s32.totalorder %s49, %s50
      %p64 = scmp.eq.s32.totalorder %s21, 1
      %p65 = por %p63, %p64
      %p67 = scmp.ne.s32.totalorder %s50, %s66
      %p68 = scmp.eq.s32.totalorder %s21, 0
      %p69 = por %p67, %p68
      %s71 = sadd.s32 %s70, 1
      %p74 = scmp.eq.s32.totalorder %s15, 1
      %p75 = scmp.ne.s32.totalorder %s70, %s72
      %p76 = scmp.eq.s32.totalorder %s15, 0
      %p77 = por %p75, %p76
      %p78 = scmp.ne.s32.totalorder %s70, %s72
      %p79 = scmp.eq.s32.totalorder %s20, 1
      %p80 = por %p78, %p79
      %p81 = scmp.ne.s32.totalorder %s72, %s73
      %p82 = scmp.eq.s32.totalorder %s20, 0
      %p83 = por %p81, %p82
      %p84 = scmp.ne.s32.totalorder %s72, %s73
      %p85 = scmp.eq.s32.totalorder %s21, 1
      %p86 = por %p84, %p85
      %p88 = scmp.ne.s32.totalorder %s73, %s87
      %p89 = scmp.eq.s32.totalorder %s21, 0
      %p90 = por %p88, %p89
      %s92 = sadd.s32 %s91, 1
      %p95 = scmp.eq.s32.totalorder %s15, 1
      %p96 = scmp.ne.s32.totalorder %s91, %s93
      %p97 = scmp.eq.s32.totalorder %s15, 0
      %p98 = por %p96, %p97
      %p99 = scmp.ne.s32.totalorder %s91, %s93
      %p100 = scmp.eq.s32.totalorder %s20, 1
      %p101 = por %p99, %p100
      %p102 = scmp.ne.s32.totalorder %s93, %s94
      %p103 = scmp.eq.s32.totalorder %s20, 0
      %p104 = por %p102, %p103
      %p105 = scmp.ne.s32.totalorder %s93, %s94
      %p106 = scmp.eq.s32.totalorder %s21, 1
      %p107 = por %p105, %p106
      %p109 = scmp.ne.s32.totalorder %s94, %s108
      %p110 = scmp.eq.s32.totalorder %s21, 0
      %p111 = por %p109, %p110
      %s112 = ssub.s32 %s15, %s22
      %p113 = scmp.eq.s32.totalorder %s112, 0
      %s115 = sadd.s32 %s114, 1
      %s116 = scalar_select %p113, %s114, %s115
      %p119 = pneg %p113
      %p120 = scmp.eq.s32.totalorder %s15, 1
      %p121 = por %p119, %p120
      %p122 = scmp.ne.s32.totalorder %s114, %s117
      %p123 = scmp.eq.s32.totalorder %s15, 0
      %p124 = por %p122, %p123
      %p125 = scmp.ne.s32.totalorder %s114, %s117
      %p126 = scmp.eq.s32.totalorder %s20, 1
      %p127 = por %p125, %p126
      %p128 = scmp.ne.s32.totalorder %s117, %s118
      %p129 = scmp.eq.s32.totalorder %s20, 0
      %p130 = por %p128, %p129
      %p131 = scmp.ne.s32.totalorder %s117, %s118
      %p132 = scmp.eq.s32.totalorder %s21, 1
      %p133 = por %p131, %p132
      %p135 = scmp.ne.s32.totalorder %s118, %s134
      %p136 = scmp.eq.s32.totalorder %s21, 0
      %p137 = por %p135, %p136
      %s138 = ssub.s32 %s15, %s22
      %p139 = scmp.eq.s32.totalorder %s138, 0
      %s141 = sadd.s32 %s140, 1
      %s142 = scalar_select %p139, %s140, %s141
      %p145 = pneg %p139
      %p146 = scmp.eq.s32.totalorder %s15, 1
      %p147 = por %p145, %p146
      %p148 = scmp.ne.s32.totalorder %s140, %s143
      %p149 = scmp.eq.s32.totalorder %s15, 0
      %p150 = por %p148, %p149
      %p151 = scmp.ne.s32.totalorder %s140, %s143
      %p152 = scmp.eq.s32.totalorder %s20, 1
      %p153 = por %p151, %p152
      %p154 = scmp.ne.s32.totalorder %s143, %s144
      %p155 = scmp.eq.s32.totalorder %s20, 0
      %p156 = por %p154, %p155
      %p157 = scmp.ne.s32.totalorder %s143, %s144
      %p158 = scmp.eq.s32.totalorder %s21, 1
      %p159 = por %p157, %p158
      %p161 = scmp.ne.s32.totalorder %s144, %s160
      %p162 = scmp.eq.s32.totalorder %s21, 0
      %p163 = por %p161, %p162
      %p164 = scmp.le.s32.totalorder 1, %s15
      %p165 = scmp.lt.s32.totalorder %s15, 3
      %p166 = pnand %p164, %p165
      %p167 = pneg %p166
      // Predicated region
      $region9: #{gcnnet_forward.2} parent=5 // pred_check
        _
      $region10: #{gcnnet_forward.2} parent=5 // pred_check_branch
        %169 = sbr.rel (%p166) target = $region12
      $region11: #{gcnnet_forward.2} parent=5 // pred_region
        %s170 = ssub.s32 %s15, 1
        // Predicated region
        $region13: #{gcnnet_forward.2} parent=11 // pred_check
          %p171 = pneg %p36
        $region14: #{gcnnet_forward.2} parent=11 // pred_check_branch
          %173 = sbr.rel (%p171) target = $region16
        $region15: #{gcnnet_forward.2} parent=11 // pred_region
          _
        $region16: #{gcnnet_forward.2} parent=11 // pred_fallthru
          _
        // Predicated region
        $region17: #{gcnnet_forward.2} parent=11 // pred_check
          %p174 = pneg %p83
        $region18: #{gcnnet_forward.2} parent=11 // pred_check_branch
          %176 = sbr.rel (%p174) target = $region20
        $region19: #{gcnnet_forward.2} parent=11 // pred_region
          _
        $region20: #{gcnnet_forward.2} parent=11 // pred_fallthru
          _
        // Predicated region
        $region21: #{gcnnet_forward.2} parent=11 // pred_check
          %p177 = pneg %p104
        $region22: #{gcnnet_forward.2} parent=11 // pred_check_branch
          %179 = sbr.rel (%p177) target = $region24
        $region23: #{gcnnet_forward.2} parent=11 // pred_region
          _
        $region24: #{gcnnet_forward.2} parent=11 // pred_fallthru
          _
      $region12: #{gcnnet_forward.2} parent=5 // pred_fallthru
        _
      %p180 = scmp.lt.s32.totalorder %s15, 2
      // Predicated region
      $region25: #{gcnnet_forward.2} parent=5 // pred_check
        %p181 = pneg %p180
      $region26: #{gcnnet_forward.2} parent=5 // pred_check_branch
        %183 = sbr.rel (%p181) target = $region28
      $region27: #{gcnnet_forward.2} parent=5 // pred_region
        // Predicated region
        $region29: #{gcnnet_forward.2} parent=27 // pred_check
          %p184 = pneg %p56
        $region30: #{gcnnet_forward.2} parent=27 // pred_check_branch
          %186 = sbr.rel (%p184) target = $region32
        $region31: #{gcnnet_forward.2} parent=27 // pred_region
          %s187 = smul.u32 2, %s15
          %p188 = scmp.lt.s32.totalorder %s187, 3
          %s189 = scalar_select %p188, %s187, 3
          %s190 = smul.addr %s189, 8
          %s191 = scalar_lea.vmem %s1, %s190
          %s192 = smul.u32 2, %s15
        $region32: #{gcnnet_forward.2} parent=27 // pred_fallthru
          _
      $region28: #{gcnnet_forward.2} parent=5 // pred_fallthru
        _
      %p193 = scmp.le.s32.totalorder 1, %s15
      %p194 = scmp.lt.s32.totalorder %s15, 3
      %p195 = pnand %p193, %p194
      %p196 = pneg %p195
      // Predicated region
      $region33: #{gcnnet_forward.2} parent=5 // pred_check
        _
      $region34: #{gcnnet_forward.2} parent=5 // pred_check_branch
        %198 = sbr.rel (%p195) target = $region36
      $region35: #{gcnnet_forward.2} parent=5 // pred_region
        %s199 = ssub.s32 %s15, 1
        %p200 = pneg %p36
        %p201 = pneg %p33
        %s202 = smul.u32 2, %s20
        %p203 = scmp.lt.s32.totalorder %s202, 3
        %s204 = scalar_select %p203, %s202, 3
        %s205 = smul.addr %s204, 8
        %s206 = scalar_lea.vmem %s1, %s205
        %p207 = pneg %p62
        %p208 = pneg %p59
        %p209 = pneg %p83
        %p210 = pneg %p80
        %p211 = pneg %p104
        %p212 = pneg %p101
        %p213 = pneg %p130
        %p214 = pneg %p127
        %s215 = sand.u32 %s117, 1
        %s216 = scalar_lea.sflag [#allocation3], %s215
        %s217 = sand.u32 %s117, 1
        %s218 = smul.addr %s217, 16
        %s219 = scalar_lea.vmem [#allocation2], %s218
        %p220 = pneg %p156
        %p221 = pneg %p153
        %p222 = scmp.lt.s32.totalorder %s20, 1
        %s223 = scalar_select %p222, %s20, 1
        %s224 = scalar_lea.vmem %s5, %s223
        %s225 = smul.u32 2, %s20
        %p226 = scmp.lt.s32.totalorder %s225, 3
        %s227 = scalar_select %p226, %s225, 3
        %s228 = smul.addr %s227, 8
        %s229 = scalar_lea.vmem %s1, %s228
        %s230 = smul.u32 2, %s20
        %s231 = smul.u32 2, %s20
        %p232 = scmp.lt.s32.totalorder %s20, 1
        %s233 = scalar_select %p232, %s20, 1
        %s234 = scalar_lea.vmem %s5, %s233
        %v236 = vld [vmem:[%s0] sm:$0xff]
        %v237 = vld [vmem:[%s0 + $0x8] sm:$0xff]
        %v238 = vpack.c.bf16 %v237, %v236
        %v239 = vld [vmem:[%s229] sm:$0xff]
        %v240 = vld [vmem:[%s229 + $0x8] sm:$0xff]
        %v241 = vld [vmem:[%s2] sm:$0xff]
        %v242 = vld [vmem:[%s2 + $0x8] sm:$0xff]
        %v243 = vld [vmem:[%s2 + $0x10] sm:$0xff]
        %v244 = vld [vmem:[%s2 + $0x18] sm:$0xff]
        %v245 = vld [vmem:[%s2 + $0x20] sm:$0xff]
        %v246 = vld [vmem:[%s2 + $0x28] sm:$0xff]
        %v247 = vld [vmem:[%s2 + $0x30] sm:$0xff]
        %v248 = vld [vmem:[%s2 + $0x38] sm:$0xff]
        %v249 = vld [vmem:[%s2 + $0x40] sm:$0xff]
        %v250 = vld [vmem:[%s2 + $0x48] sm:$0xff]
        %v251 = vld [vmem:[%s2 + $0x50] sm:$0xff]
        %v252 = vld [vmem:[%s2 + $0x58] sm:$0xff]
        %v253 = vld [vmem:[%s2 + $0x60] sm:$0xff]
        %v254 = vld [vmem:[%s2 + $0x68] sm:$0xff]
        %v255 = vld [vmem:[%s2 + $0x70] sm:$0xff]
        %v256 = vld [vmem:[%s2 + $0x78] sm:$0xff]
        %v257 = vpack.c.bf16 %v242, %v241
        %v258 = vpack.c.bf16 %v244, %v243
        %v259 = vpack.c.bf16 %v246, %v245
        %v260 = vpack.c.bf16 %v248, %v247
        %v261 = vpack.c.bf16 %v250, %v249
        %v262 = vpack.c.bf16 %v252, %v251
        %v263 = vpack.c.bf16 %v254, %v253
        %v264 = vpack.c.bf16 %v256, %v255
        %v265 = vld [vmem:[%s3] sm:$0x1]
        %v266 = vpack.c.bf16 %v240, %v239
        %vm267 = vcmask 130048
        %v269 = vsel %vm267, %v238, 0
        %271 = vmatpush.bf16.msra.mxu0 0
        %272 = vmatpush.bf16.msra.mxu0 0
        %273 = vmatpush.bf16.msra.mxu0 0
        %274 = vmatpush.bf16.msra.mxu0 0
        %275 = vmatpush.bf16.msra.mxu0 0
        %276 = vmatpush.bf16.msra.mxu0 0
        %277 = vmatpush.bf16.msra.mxu0 0
        %278 = vmatpush.bf16.msra.mxu0 %v266
        %279 = vmatmul.bf16.gmra.mxu0 %v269
        %v280 = vpop.f32.mrf.mxu0
        %v281 = vadd.f32 0.0, %v280
        %v282 = vpop.f32.mrf.mxu0
        %v283 = vadd.f32 0.0, %v282
        %284 = vdwg.mxu0
        %v285 = vpack.c.bf16 %v283, %v281
        %v287 = vperm.slane %v265, 0
        %289 = vmatpush.bf16.msra.mxu0 %v264
        %290 = vmatpush.bf16.msra.mxu0 %v263
        %291 = vmatpush.bf16.msra.mxu0 %v262
        %292 = vmatpush.bf16.msra.mxu0 %v261
        %293 = vmatpush.bf16.msra.mxu0 %v260
        %294 = vmatpush.bf16.msra.mxu0 %v259
        %295 = vmatpush.bf16.msra.mxu0 %v258
        %296 = vmatpush.bf16.msra.mxu0 %v257
        %297 = vmatmul.bf16.gmra.mxu0 %v285
        %v298 = vpop.f32.mrf.mxu0
        %v299 = vadd.f32 %v287, %v298
        %v300 = vpop.f32.mrf.mxu0
        %v301 = vadd.f32 %v287, %v300
        %302 = vdwg.mxu0
        %v303 = vmul.f32 %v299, %v299
        %v304 = vmul.f32 %v301, %v301
        %305 = vadd.xlane.f32.xlu0 %v303
        %v306 = vpop.xlane.xlu0 %305
        %307 = vadd.xlane.f32.xlu0 %v304
        %v308 = vpop.xlane.xlu0 %307
        %v309 = vadd.f32 %v306, 1e-24
        %v310 = vadd.f32 %v308, 1e-24
        %v311 = vrsqrt.pop %v309
        %v312 = vmul.f32 %v311, %v309
        %v313 = vmul.f32 %v312, %v311
        %v314 = vmul.f32 0.5, %v313
        %v315 = vsub.f32 1.5, %v314
        %v316 = vmul.f32 %v311, %v315
        %vm317 = vweird.f32 %v309
        %vm318 = vweird.f32 %v311
        %vm319 = vmor %vm317, %vm318
        %v320 = vsel %vm319, %v311, %v316
        %v321 = vrsqrt.pop %v310
        %v322 = vmul.f32 %v321, %v310
        %v323 = vmul.f32 %v322, %v321
        %v324 = vmul.f32 0.5, %v323
        %v325 = vsub.f32 1.5, %v324
        %v326 = vmul.f32 %v321, %v325
        %vm327 = vweird.f32 %v310
        %vm328 = vweird.f32 %v321
        %vm329 = vmor %vm327, %vm328
        %v330 = vsel %vm329, %v321, %v326
        %v331 = vmul.f32 %v320, 0.999995
        %v332 = vmul.f32 %v330, 0.999995
        %v333 = vmul.f32 %v299, %v331
        %v334 = vmul.f32 %v301, %v332
        %v335 = vmax.f32 %v333, 0.0
        %v336 = vmax.f32 %v334, 0.0
        %s337 = scalar_lea.vmem %s2, 128
        %v338 = vld [vmem:[%s337] sm:$0xff]
        %v339 = vld [vmem:[%s337 + $0x8] sm:$0xff]
        %v340 = vld [vmem:[%s337 + $0x10] sm:$0xff]
        %v341 = vld [vmem:[%s337 + $0x18] sm:$0xff]
        %v342 = vld [vmem:[%s337 + $0x20] sm:$0xff]
        %v343 = vld [vmem:[%s337 + $0x28] sm:$0xff]
        %v344 = vld [vmem:[%s337 + $0x30] sm:$0xff]
        %v345 = vld [vmem:[%s337 + $0x38] sm:$0xff]
        %v346 = vld [vmem:[%s337 + $0x40] sm:$0xff]
        %v347 = vld [vmem:[%s337 + $0x48] sm:$0xff]
        %v348 = vld [vmem:[%s337 + $0x50] sm:$0xff]
        %v349 = vld [vmem:[%s337 + $0x58] sm:$0xff]
        %v350 = vld [vmem:[%s337 + $0x60] sm:$0xff]
        %v351 = vld [vmem:[%s337 + $0x68] sm:$0xff]
        %v352 = vld [vmem:[%s337 + $0x70] sm:$0xff]
        %v353 = vld [vmem:[%s337 + $0x78] sm:$0xff]
        %v354 = vpack.c.bf16 %v339, %v338
        %v355 = vpack.c.bf16 %v341, %v340
        %v356 = vpack.c.bf16 %v343, %v342
        %v357 = vpack.c.bf16 %v345, %v344
        %v358 = vpack.c.bf16 %v347, %v346
        %v359 = vpack.c.bf16 %v349, %v348
        %v360 = vpack.c.bf16 %v351, %v350
        %v361 = vpack.c.bf16 %v353, %v352
        %s362 = scalar_lea.vmem %s3, 1
        %v363 = vld [vmem:[%s362] sm:$0x1]
        %v364 = vpack.c.bf16 %v336, %v335
        %365 = vmatpush.bf16.msra.mxu0 0
        %366 = vmatpush.bf16.msra.mxu0 0
        %367 = vmatpush.bf16.msra.mxu0 0
        %368 = vmatpush.bf16.msra.mxu0 0
        %369 = vmatpush.bf16.msra.mxu0 0
        %370 = vmatpush.bf16.msra.mxu0 0
        %371 = vmatpush.bf16.msra.mxu0 0
        %372 = vmatpush.bf16.msra.mxu0 %v364
        %373 = vmatmul.bf16.gmra.mxu0 %v269
        %v374 = vpop.f32.mrf.mxu0
        %v375 = vadd.f32 0.0, %v374
        %v376 = vpop.f32.mrf.mxu0
        %v377 = vadd.f32 0.0, %v376
        %378 = vdwg.mxu0
        %v379 = vpack.c.bf16 %v377, %v375
        %v381 = vperm.slane %v363, 0
        %383 = vmatpush.bf16.msra.mxu0 %v361
        %384 = vmatpush.bf16.msra.mxu0 %v360
        %385 = vmatpush.bf16.msra.mxu0 %v359
        %386 = vmatpush.bf16.msra.mxu0 %v358
        %387 = vmatpush.bf16.msra.mxu0 %v357
        %388 = vmatpush.bf16.msra.mxu0 %v356
        %389 = vmatpush.bf16.msra.mxu0 %v355
        %390 = vmatpush.bf16.msra.mxu0 %v354
        %391 = vmatmul.bf16.gmra.mxu0 %v379
        %v392 = vpop.f32.mrf.mxu0
        %v393 = vadd.f32 %v381, %v392
        %v394 = vpop.f32.mrf.mxu0
        %v395 = vadd.f32 %v381, %v394
        %396 = vdwg.mxu0
        %v397 = vmul.f32 %v393, %v393
        %v398 = vmul.f32 %v395, %v395
        %399 = vadd.xlane.f32.xlu0 %v397
        %v400 = vpop.xlane.xlu0 %399
        %401 = vadd.xlane.f32.xlu0 %v398
        %v402 = vpop.xlane.xlu0 %401
        %v403 = vadd.f32 %v400, 1e-24
        %v404 = vadd.f32 %v402, 1e-24
        %v405 = vrsqrt.pop %v403
        %v406 = vmul.f32 %v405, %v403
        %v407 = vmul.f32 %v406, %v405
        %v408 = vmul.f32 0.5, %v407
        %v409 = vsub.f32 1.5, %v408
        %v410 = vmul.f32 %v405, %v409
        %vm411 = vweird.f32 %v403
        %vm412 = vweird.f32 %v405
        %vm413 = vmor %vm411, %vm412
        %v414 = vsel %vm413, %v405, %v410
        %v415 = vrsqrt.pop %v404
        %v416 = vmul.f32 %v415, %v404
        %v417 = vmul.f32 %v416, %v415
        %v418 = vmul.f32 0.5, %v417
        %v419 = vsub.f32 1.5, %v418
        %v420 = vmul.f32 %v415, %v419
        %vm421 = vweird.f32 %v404
        %vm422 = vweird.f32 %v415
        %vm423 = vmor %vm421, %vm422
        %v424 = vsel %vm423, %v415, %v420
        %v425 = vmul.f32 %v414, 0.999995
        %v426 = vmul.f32 %v424, 0.999995
        %v427 = vmul.f32 %v393, %v425
        %v428 = vmul.f32 %v395, %v426
        %v429 = vmax.f32 %v427, 0.0
        %v430 = vmax.f32 %v428, 0.0
        %s431 = scalar_lea.vmem %s2, 256
        %v432 = vld [vmem:[%s431] sm:$0xff]
        %v433 = vld [vmem:[%s431 + $0x8] sm:$0xff]
        %v434 = vld [vmem:[%s431 + $0x10] sm:$0xff]
        %v435 = vld [vmem:[%s431 + $0x18] sm:$0xff]
        %v436 = vld [vmem:[%s431 + $0x20] sm:$0xff]
        %v437 = vld [vmem:[%s431 + $0x28] sm:$0xff]
        %v438 = vld [vmem:[%s431 + $0x30] sm:$0xff]
        %v439 = vld [vmem:[%s431 + $0x38] sm:$0xff]
        %v440 = vld [vmem:[%s431 + $0x40] sm:$0xff]
        %v441 = vld [vmem:[%s431 + $0x48] sm:$0xff]
        %v442 = vld [vmem:[%s431 + $0x50] sm:$0xff]
        %v443 = vld [vmem:[%s431 + $0x58] sm:$0xff]
        %v444 = vld [vmem:[%s431 + $0x60] sm:$0xff]
        %v445 = vld [vmem:[%s431 + $0x68] sm:$0xff]
        %v446 = vld [vmem:[%s431 + $0x70] sm:$0xff]
        %v447 = vld [vmem:[%s431 + $0x78] sm:$0xff]
        %v448 = vpack.c.bf16 %v433, %v432
        %v449 = vpack.c.bf16 %v435, %v434
        %v450 = vpack.c.bf16 %v437, %v436
        %v451 = vpack.c.bf16 %v439, %v438
        %v452 = vpack.c.bf16 %v441, %v440
        %v453 = vpack.c.bf16 %v443, %v442
        %v454 = vpack.c.bf16 %v445, %v444
        %v455 = vpack.c.bf16 %v447, %v446
        %s456 = scalar_lea.vmem %s3, 2
        %v457 = vld [vmem:[%s456] sm:$0x1]
        %v458 = vpack.c.bf16 %v430, %v429
        %459 = vmatpush.bf16.msra.mxu0 0
        %460 = vmatpush.bf16.msra.mxu0 0
        %461 = vmatpush.bf16.msra.mxu0 0
        %462 = vmatpush.bf16.msra.mxu0 0
        %463 = vmatpush.bf16.msra.mxu0 0
        %464 = vmatpush.bf16.msra.mxu0 0
        %465 = vmatpush.bf16.msra.mxu0 0
        %466 = vmatpush.bf16.msra.mxu0 %v458
        %467 = vmatmul.bf16.gmra.mxu0 %v269
        %v468 = vpop.f32.mrf.mxu0
        %v469 = vadd.f32 0.0, %v468
        %v470 = vpop.f32.mrf.mxu0
        %v471 = vadd.f32 0.0, %v470
        %472 = vdwg.mxu0
        %v473 = vpack.c.bf16 %v471, %v469
        %v475 = vperm.slane %v457, 0
        %477 = vmatpush.bf16.msra.mxu0 %v455
        %478 = vmatpush.bf16.msra.mxu0 %v454
        %479 = vmatpush.bf16.msra.mxu0 %v453
        %480 = vmatpush.bf16.msra.mxu0 %v452
        %481 = vmatpush.bf16.msra.mxu0 %v451
        %482 = vmatpush.bf16.msra.mxu0 %v450
        %483 = vmatpush.bf16.msra.mxu0 %v449
        %484 = vmatpush.bf16.msra.mxu0 %v448
        %485 = vmatmul.bf16.gmra.mxu0 %v473
        %v486 = vpop.f32.mrf.mxu0
        %v487 = vadd.f32 %v475, %v486
        %v488 = vpop.f32.mrf.mxu0
        %v489 = vadd.f32 %v475, %v488
        %490 = vdwg.mxu0
        %v491 = vmul.f32 %v487, %v487
        %v492 = vmul.f32 %v489, %v489
        %493 = vadd.xlane.f32.xlu0 %v491
        %v494 = vpop.xlane.xlu0 %493
        %495 = vadd.xlane.f32.xlu0 %v492
        %v496 = vpop.xlane.xlu0 %495
        %v497 = vadd.f32 %v494, 1e-24
        %v498 = vadd.f32 %v496, 1e-24
        %v499 = vrsqrt.pop %v497
        %v500 = vmul.f32 %v499, %v497
        %v501 = vmul.f32 %v500, %v499
        %v502 = vmul.f32 0.5, %v501
        %v503 = vsub.f32 1.5, %v502
        %v504 = vmul.f32 %v499, %v503
        %vm505 = vweird.f32 %v497
        %vm506 = vweird.f32 %v499
        %vm507 = vmor %vm505, %vm506
        %v508 = vsel %vm507, %v499, %v504
        %v509 = vrsqrt.pop %v498
        %v510 = vmul.f32 %v509, %v498
        %v511 = vmul.f32 %v510, %v509
        %v512 = vmul.f32 0.5, %v511
        %v513 = vsub.f32 1.5, %v512
        %v514 = vmul.f32 %v509, %v513
        %vm515 = vweird.f32 %v498
        %vm516 = vweird.f32 %v509
        %vm517 = vmor %vm515, %vm516
        %v518 = vsel %vm517, %v509, %v514
        %v519 = vmul.f32 %v487, %v508
        %v520 = vmul.f32 %v489, %v518
        %521 = vst [vmem:[%s219] sm:$0xff] %v519
        %522 = vst [vmem:[%s219 + $0x8] sm:$0xff] %v520
        %v523 = vmax.f32 %v519, %v520
        %v524 = vrot.slane %v523, 4
        %v525 = vmax.f32 %v523, %v524
        %v526 = vrot.slane %v525, 2
        %v527 = vmax.f32 %v525, %v526
        %v528 = vrot.slane %v527, 1
        %v529 = vmax.f32 %v527, %v528
        %530 = vst [vmem:[%s234] sm:$0x1] %v529
        %s531 = sand.u32 %s117, 1
        %s532 = scalar_lea.sflag [#allocation3], %s531
        %s533 = sand.u32 %s117, 1
        %s534 = smul.addr %s533, 16
        %s535 = scalar_lea.vmem [#allocation2], %s534
        %p536 = scmp.lt.s32.totalorder %s20, 1
        %s537 = scalar_select %p536, %s20, 1
        %s538 = scalar_lea.vmem %s5, %s537
        // Predicated region
        $region37: #{gcnnet_forward.2} parent=35 // pred_check
          %p539 = pneg %p127
        $region38: #{gcnnet_forward.2} parent=35 // pred_check_branch
          %541 = sbr.rel (%p539) target = $region40
        $region39: #{gcnnet_forward.2} parent=35 // pred_region
          %s542 = smul.u32 2, %s20
          %544 = vsyncadd %s532, 0
          %s545 = smul.addr %s542, 8
          %s546 = scalar_lea.hbm %s4, %s545
          %s547 = sshll.u32 %s535, 4
          %s548 = int_to_ptr.vmem [resolvable:$true] %s547
          %s549 = sshll.u32 %s546, 4
          %s550 = int_to_ptr.hbm [resolvable:$true] %s549
          %555 = dma.vmem_to_hbm [thread:$0]  %s548, 256, %s550, %s532, 128, 128, 8
        $region40: #{gcnnet_forward.2} parent=35 // pred_fallthru
          _
        // Predicated region
        $region41: #{gcnnet_forward.2} parent=35 // pred_check
          %p556 = pneg %p153
        $region42: #{gcnnet_forward.2} parent=35 // pred_check_branch
          %558 = sbr.rel (%p556) target = $region44
        $region43: #{gcnnet_forward.2} parent=35 // pred_region
          _
        $region44: #{gcnnet_forward.2} parent=35 // pred_fallthru
          _
      $region36: #{gcnnet_forward.2} parent=5 // pred_fallthru
        _
      %p559 = scmp.le.s32.totalorder 2, %s15
      // Predicated region
      $region45: #{gcnnet_forward.2} parent=5 // pred_check
        %p560 = pneg %p559
      $region46: #{gcnnet_forward.2} parent=5 // pred_check_branch
        %562 = sbr.rel (%p560) target = $region48
      $region47: #{gcnnet_forward.2} parent=5 // pred_region
        %s563 = ssub.s32 %s15, 2
        // Predicated region
        $region49: #{gcnnet_forward.2} parent=47 // pred_check
          %p564 = pneg %p133
        $region50: #{gcnnet_forward.2} parent=47 // pred_check_branch
          %566 = sbr.rel (%p564) target = $region52
        $region51: #{gcnnet_forward.2} parent=47 // pred_region
          %s567 = sand.u32 %s118, 1
          %s568 = scalar_lea.sflag [#allocation3], %s567
          %s569 = sand.u32 %s118, 1
          %s570 = smul.addr %s569, 16
          %s571 = scalar_lea.vmem [#allocation2], %s570
          %573 = dma.done %s568, 256
        $region52: #{gcnnet_forward.2} parent=47 // pred_fallthru
          _
        // Predicated region
        $region53: #{gcnnet_forward.2} parent=47 // pred_check
          %p574 = pneg %p159
        $region54: #{gcnnet_forward.2} parent=47 // pred_check_branch
          %576 = sbr.rel (%p574) target = $region56
        $region55: #{gcnnet_forward.2} parent=47 // pred_region
          %p577 = scmp.lt.s32.totalorder %s21, 1
          %s578 = scalar_select %p577, %s21, 1
          %s579 = scalar_lea.vmem %s5, %s578
        $region56: #{gcnnet_forward.2} parent=47 // pred_fallthru
          _
      $region48: #{gcnnet_forward.2} parent=5 // pred_fallthru
        _
    $region6: #{gcnnet_forward.2} parent=1 // loop_footer
      %s19 = sadd.s32 1, %s15
    $region7: #{gcnnet_forward.2} parent=1 // loop_footer_branch
      %14 = sbr.rel target = $region3
    $region8: #{gcnnet_forward.2} parent=1 // loop_exit
      _
    %580 = vsyncpa [#allocation3], 1
    %s581 = scalar_lea.sflag [#allocation3], 1
    %582 = vsyncpa %s581, 1

</llo_original>
